<compile_context>
chip_gen: v6e
topology: v6e:2x2x1
jax: 0.10.0
libtpu: 0.0.40
codegen_flags: <defaults>
</compile_context>

<pallas_src>
import functools
import math

import jax
import jax.numpy as jnp
from jax import lax
from jax.experimental import pallas as pl
from jax.experimental.pallas import tpu as pltpu


# Abramowitz & Stegun 4.4.46: acos(a) = sqrt(1-a) * poly(a) for a in [0,1],
# |error| < 2e-8.  Negative inputs via acos(c) = pi - acos(-c).
_ACOS_COEFFS = (1.5707963050, -0.2145988016, 0.0889789874, -0.0501743046,
                0.0308918810, -0.0170881256, 0.0066700901, -0.0012624911)


def _acos(c):
  """Polynomial arccos (VPU mul/add + one sqrt); avoids Mosaic acos lowering."""
  a = jnp.abs(c)
  p = jnp.float32(_ACOS_COEFFS[-1])
  for coef in reversed(_ACOS_COEFFS[:-1]):          # Horner, unrolled at trace time
    p = p * a + jnp.float32(coef)
  r = jnp.sqrt(jnp.maximum(1.0 - a, 0.0)) * p
  return jnp.where(c >= 0.0, r, jnp.float32(math.pi) - r)


def _mhe_kernel(xt_ref, loss_ref, gram_ref, *, n_views: int, inv_pairs: float):
  """Grid: (L, D/block_d).  Axis 0 = independent problems ("parallel"),
  axis 1 = lane-axis reduction over feat_dim ("arbitrary", resident scratch)."""
  k = pl.program_id(1)

  @pl.when(k == 0)
  def _():
    gram_ref[...] = jnp.zeros_like(gram_ref)

  xb = xt_ref[...]                       # (N, block_d), lane-dense, native dtype
  # Raw (un-normalized) gram accumulates in the resident f32 scratch:
  # gram += xb @ xb^T  (contract the lane axis of both operands on the MXU).
  gram_ref[...] += lax.dot_general(
      xb, xb, (((1,), (1,)), ((), ())),
      preferred_element_type=jnp.float32)

  @pl.when(k == pl.num_programs(1) - 1)
  def _():
    n = n_views
    g = gram_ref[...]
    row = lax.broadcasted_iota(jnp.int32, (n, n), 0)
    col = lax.broadcasted_iota(jnp.int32, (n, n), 1)
    diag = row == col
    # Column norms^2 of x sit on the diagonal of the raw gram.  g is symmetric,
    # so lane- and sublane-oriented masked reductions read the same values and
    # avoid relying on a (1,N)<->(N,1) transpose lowering.
    sq_lane = jnp.sum(jnp.where(diag, g, 0.0), axis=0, keepdims=True)    # (1, N)
    sq_sub = jnp.sum(jnp.where(diag, g, 0.0), axis=1, keepdims=True)     # (N, 1)
    # 1 / max(||x_j||, 1e-12)  (F.normalize eps), via EUP rsqrt.
    inv_lane = lax.rsqrt(jnp.maximum(sq_lane, 1e-24))
    inv_sub = lax.rsqrt(jnp.maximum(sq_sub, 1e-24))
    cosm = jnp.clip(g * inv_sub * inv_lane, -1.0 + 1e-05, 1.0 - 1e-05)
    ang = _acos(cosm)
    energy = jnp.where(col > row, 1.0 / (ang * ang), 0.0)   # strict upper triangle
    total = jnp.sum(jnp.sum(energy, axis=1, keepdims=True), axis=0, keepdims=True)
    loss_ref[...] = total * jnp.float32(inv_pairs)           # (1, 1) scalar block


# Cap on the D-block so (a) per-step DMA blocks stay MiB-scale and (b) the
# implicit transposed RHS operand of A @ A^T (lane-padded to 128) stays a few
# MiB even within v7x's 64 MiB VMEM.
_MAX_BLOCK_D = 8192


def _choose_block_d(feat_dim: int) -> int:
  if feat_dim <= _MAX_BLOCK_D:
    return feat_dim                         # single grid step over D
  for bd in range(_MAX_BLOCK_D, 127, -128):
    if feat_dim % bd == 0:
      return bd
  # TODO(synk): pad the final D-block instead of falling back to one full-extent
  # block when a huge feat_dim has no multiple-of-128 divisor <= _MAX_BLOCK_D.
  return feat_dim


def _mhe_losses(xt, *, block_d=None):
  """xt: (L, n_views, feat_dim) lane-dense layout.  Returns (L,) f32 losses."""
  L, N, D = xt.shape
  if N < 2:
    raise ValueError("MHE needs n_views >= 2")
  if block_d is None:
    block_d = _choose_block_d(D)
  assert D % block_d == 0 and (block_d == D or block_d % 128 == 0)
  inv_pairs = 1.0 / (N * (N - 1) * 0.5)

  n_pad = max(8, ((N + 7) // 8) * 8)
  itemsize = jnp.dtype(xt.dtype).itemsize
  in_buf_bytes = 2 * n_pad * max(block_d, 128) * itemsize   # double-buffered input
  xpose_bytes = block_d * 128 * 4                           # transposed MXU operand
  vmem_limit = int(min(max(in_buf_bytes + xpose_bytes + (2 << 20), 16 << 20),
                       32 << 20))

  out = pl.pallas_call(
      functools.partial(_mhe_kernel, n_views=N, inv_pairs=inv_pairs),
      out_shape=jax.ShapeDtypeStruct((L, 1, 1), jnp.float32),
      grid_spec=pltpu.PrefetchScalarGridSpec(
          num_scalar_prefetch=0,
          grid=(L, D // block_d),
          in_specs=[pl.BlockSpec((None, N, block_d), lambda l, k: (l, 0, k))],
          out_specs=pl.BlockSpec((None, 1, 1), lambda l, k: (l, 0, 0)),
          scratch_shapes=[pltpu.VMEM((N, N), jnp.float32)],
      ),
      compiler_params=pltpu.CompilerParams(
          # TODO(synk): for very large feat_dim on v7x, additionally split D
          # across the two TensorCores (extra size-2 "parallel" axis + tiny
          # partial-gram merge) for the ~2x memory-bound win.
          dimension_semantics=("parallel", "arbitrary"),
          vmem_limit_bytes=vmem_limit),
  )(xt)
  return out.reshape(L)


def mhe_loss_pallas(x, *, block_d=None):
  """MHE loss for one problem.  x: (feat_dim, n_views) -- the module layout."""
  # Layout plumbing only (8 KiB at the shipped size): put the big reduction dim
  # on the lane (fast) axis.  Callers that already hold (n_views, feat_dim)
  # should call mhe_loss_pallas_batched / _mhe_losses directly and skip this.
  return _mhe_losses(jnp.transpose(x)[None], block_d=block_d)[0]


def mhe_loss_pallas_batched(xs, *, block_d=None):
  """Per-layer MHE losses in ONE pallas_call.  xs: (L, feat_dim, n_views)."""
  return _mhe_losses(jnp.transpose(xs, (0, 2, 1)), block_d=block_d)


def mhe_reference(x):
  """Plain-JAX reference mirroring the PyTorch forward exactly."""
  norm = jnp.maximum(jnp.sqrt(jnp.sum(x * x, axis=0, keepdims=True)), 1e-12)
  w = x / norm
  g = jnp.clip(w.T @ w, -1.0 + 1e-05, 1.0 - 1e-05)
  ang = jnp.arccos(g)
  n = g.shape[0]
  e = jnp.triu(ang ** -2.0, k=1)
  return jnp.sum(e) / (n * (n - 1) * 0.5)


if __name__ == "__main__":
  # Small shapes consistent with the module layout (module default is
  # feat_dim=2048, n_views=3; kept small here).
  feat_dim, n_views, n_layers = 256, 8, 3

  key = jax.random.PRNGKey(0)
  x = jax.random.normal(key, (feat_dim, n_views), dtype=jnp.float32)
  # NOTE: the module's xavier_normal_ nn.Parameter `w` is overwritten with x in
  # forward() before use, so it never influences the output and is not created.

  loss = jax.block_until_ready(jax.jit(mhe_loss_pallas)(x))
  ref = jax.block_until_ready(mhe_reference(x))
  assert jnp.isfinite(loss), f"non-finite loss: {loss}"
  assert jnp.allclose(loss, ref, rtol=1e-4, atol=1e-5), (loss, ref)

  # Batched path: several per-layer MHE problems share one pallas_call
  # (amortizes dispatch overhead, per the perf review).
  xs = jax.random.normal(jax.random.PRNGKey(1),
                         (n_layers, feat_dim, n_views), dtype=jnp.float32)
  losses = jax.block_until_ready(jax.jit(mhe_loss_pallas_batched)(xs))
  refs = jnp.stack([mhe_reference(xs[i]) for i in range(n_layers)])
  assert jnp.allclose(losses, refs, rtol=1e-4, atol=1e-5), (losses, refs)

  print("KERNEL_OK")
</pallas_src>

<mosaic_0001>
module attributes {stable_mosaic.version = 11 : i64} {
  func.func @_mhe_kernel(%arg0: i32, %arg1: i32, %arg2: memref<1x8x256xf32, #tpu.memory_space<vmem>>, %arg3: memref<1x1x1xf32, #tpu.memory_space<vmem>>, %arg4: memref<8x8xf32, #tpu.memory_space<vmem>>) attributes {dimension_semantics = [#tpu.dimension_semantics<parallel>, #tpu.dimension_semantics<arbitrary>], iteration_bounds = array<i64: 1, 1>, scalar_prefetch = 0 : i64, scratch_operands = 1 : i64, tpu.core_type = #tpu.core_type<tc>, window_params = [{transform_indices = @transform_0, window_bounds = array<i64: 1, 8, 256>}, {transform_indices = @transform_1, window_bounds = array<i64: 1, 1, 1>}]} {
    %c0_i32 = arith.constant 0 : i32
    %0 = arith.cmpi eq, %arg1, %c0_i32 : i32
    %1 = arith.extui %0 : i1 to i32
    %c0_i32_0 = arith.constant 0 : i32
    %2 = arith.cmpi ne, %1, %c0_i32_0 : i32
    scf.if %2 {
      %cst_9 = arith.constant 0.000000e+00 : f32
      %12 = vector.broadcast %cst_9 : f32 to vector<8x8xf32>
      %c0_10 = arith.constant 0 : index
      %c0_11 = arith.constant 0 : index
      %13 = vector.load %arg4[%c0_10, %c0_11] : memref<8x8xf32, #tpu.memory_space<vmem>>, vector<8x8xf32>
      tpu.vector_store %arg4[%c0_10, %c0_11], %12 {strides = array<i32>} : memref<8x8xf32, #tpu.memory_space<vmem>>, vector<8x8xf32>,
    } else {
    }
    %c0 = arith.constant 0 : index
    %c0_1 = arith.constant 0 : index
    %c0_2 = arith.constant 0 : index
    %3 = vector.load %arg2[%c0, %c0_1, %c0_2] : memref<1x8x256xf32, #tpu.memory_space<vmem>>, vector<1x8x256xf32>
    %4 = vector.shape_cast %3 : vector<1x8x256xf32> to vector<8x256xf32>
    %c0_3 = arith.constant 0 : index
    %c0_4 = arith.constant 0 : index
    %5 = vector.load %arg4[%c0_3, %c0_4] : memref<8x8xf32, #tpu.memory_space<vmem>>, vector<8x8xf32>
    %cst = arith.constant dense<0.000000e+00> : vector<8x8xf32>
    %6 = tpu.matmul %4, %4, %cst {dimension_numbers = #tpu.dot_dimension_numbers<[1], [1], [0], [0], [0, 0, 1, 0], [], []>} : vector<8x256xf32>, vector<8x256xf32>, vector<8x8xf32> -> vector<8x8xf32>
    %7 = arith.addf %5, %6 : vector<8x8xf32>
    %c0_5 = arith.constant 0 : index
    %c0_6 = arith.constant 0 : index
    %8 = vector.load %arg4[%c0_5, %c0_6] : memref<8x8xf32, #tpu.memory_space<vmem>>, vector<8x8xf32>
    tpu.vector_store %arg4[%c0_5, %c0_6], %7 {strides = array<i32>} : memref<8x8xf32, #tpu.memory_space<vmem>>, vector<8x8xf32>,
    %c0_i32_7 = arith.constant 0 : i32
    %9 = arith.cmpi eq, %arg1, %c0_i32_7 : i32
    %10 = arith.extui %9 : i1 to i32
    %c0_i32_8 = arith.constant 0 : i32
    %11 = arith.cmpi ne, %10, %c0_i32_8 : i32
    scf.if %11 {
      %c0_9 = arith.constant 0 : index
      %c0_10 = arith.constant 0 : index
      %12 = vector.load %arg4[%c0_9, %c0_10] : memref<8x8xf32, #tpu.memory_space<vmem>>, vector<8x8xf32>
      %13 = tpu.iota {dimensions = array<i32: 0>} : vector<8x8xi32>
      %14 = tpu.iota {dimensions = array<i32: 1>} : vector<8x8xi32>
      %15 = arith.cmpi eq, %13, %14 : vector<8x8xi32>
      %cst_11 = arith.constant 0.000000e+00 : f32
      %16 = vector.broadcast %cst_11 : f32 to vector<8x8xf32>
      %17 = arith.select %15, %12, %16 : vector<8x8xi1>, vector<8x8xf32>
      %cst_12 = arith.constant dense<0.000000e+00> : vector<8xf32>
      %18 = vector.multi_reduction <add>, %17, %cst_12 [0] : vector<8x8xf32> to vector<8xf32>
      %19 = vector.shape_cast %18 : vector<8xf32> to vector<1x8xf32>
      %cst_13 = arith.constant 0.000000e+00 : f32
      %20 = vector.broadcast %cst_13 : f32 to vector<8x8xf32>
      %21 = arith.select %15, %12, %20 : vector<8x8xi1>, vector<8x8xf32>
      %cst_14 = arith.constant dense<0.000000e+00> : vector<8xf32>
      %22 = vector.multi_reduction <add>, %21, %cst_14 [1] : vector<8x8xf32> to vector<8xf32>
      %23 = vector.shape_cast %22 : vector<8xf32> to vector<8x1xf32>
      %cst_15 = arith.constant 1.000000e-24 : f32
      %24 = vector.broadcast %cst_15 : f32 to vector<1x8xf32>
      %25 = arith.maximumf %19, %24 : vector<1x8xf32>
      %26 = math.rsqrt %25 : vector<1x8xf32>
      %cst_16 = arith.constant 1.000000e-24 : f32
      %27 = vector.broadcast %cst_16 : f32 to vector<8x1xf32>
      %28 = arith.maximumf %23, %27 : vector<8x1xf32>
      %29 = math.rsqrt %28 : vector<8x1xf32>
      %30 = vector.broadcast %29 : vector<8x1xf32> to vector<8x8xf32>
      %31 = arith.mulf %12, %30 : vector<8x8xf32>
      %32 = vector.broadcast %26 : vector<1x8xf32> to vector<8x8xf32>
      %33 = arith.mulf %31, %32 : vector<8x8xf32>
      %cst_17 = arith.constant -0.999989986 : f32
      %cst_18 = arith.constant 0.999989986 : f32
      %34 = vector.broadcast %cst_17 : f32 to vector<8x8xf32>
      %35 = arith.maximumf %34, %33 : vector<8x8xf32>
      %36 = vector.broadcast %cst_18 : f32 to vector<8x8xf32>
      %37 = arith.minimumf %36, %35 : vector<8x8xf32>
      %38 = math.absf %37 : vector<8x8xf32>
      %cst_19 = arith.constant -0.0012624911 : f32
      %39 = vector.broadcast %cst_19 : f32 to vector<8x8xf32>
      %40 = arith.mulf %39, %38 : vector<8x8xf32>
      %cst_20 = arith.constant 6.670090e-03 : f32
      %41 = vector.broadcast %cst_20 : f32 to vector<8x8xf32>
      %42 = arith.addf %40, %41 : vector<8x8xf32>
      %43 = arith.mulf %42, %38 : vector<8x8xf32>
      %cst_21 = arith.constant -0.0170881264 : f32
      %44 = vector.broadcast %cst_21 : f32 to vector<8x8xf32>
      %45 = arith.addf %43, %44 : vector<8x8xf32>
      %46 = arith.mulf %45, %38 : vector<8x8xf32>
      %cst_22 = arith.constant 0.0308918804 : f32
      %47 = vector.broadcast %cst_22 : f32 to vector<8x8xf32>
      %48 = arith.addf %46, %47 : vector<8x8xf32>
      %49 = arith.mulf %48, %38 : vector<8x8xf32>
      %cst_23 = arith.constant -0.0501743034 : f32
      %50 = vector.broadcast %cst_23 : f32 to vector<8x8xf32>
      %51 = arith.addf %49, %50 : vector<8x8xf32>
      %52 = arith.mulf %51, %38 : vector<8x8xf32>
      %cst_24 = arith.constant 0.0889789909 : f32
      %53 = vector.broadcast %cst_24 : f32 to vector<8x8xf32>
      %54 = arith.addf %52, %53 : vector<8x8xf32>
      %55 = arith.mulf %54, %38 : vector<8x8xf32>
      %cst_25 = arith.constant -0.214598805 : f32
      %56 = vector.broadcast %cst_25 : f32 to vector<8x8xf32>
      %57 = arith.addf %55, %56 : vector<8x8xf32>
      %58 = arith.mulf %57, %38 : vector<8x8xf32>
      %cst_26 = arith.constant 1.57079625 : f32
      %59 = vector.broadcast %cst_26 : f32 to vector<8x8xf32>
      %60 = arith.addf %58, %59 : vector<8x8xf32>
      %cst_27 = arith.constant 1.000000e+00 : f32
      %61 = vector.broadcast %cst_27 : f32 to vector<8x8xf32>
      %62 = arith.subf %61, %38 : vector<8x8xf32>
      %cst_28 = arith.constant 0.000000e+00 : f32
      %63 = vector.broadcast %cst_28 : f32 to vector<8x8xf32>
      %64 = arith.maximumf %62, %63 : vector<8x8xf32>
      %65 = math.sqrt %64 : vector<8x8xf32>
      %66 = arith.mulf %65, %60 : vector<8x8xf32>
      %cst_29 = arith.constant 0.000000e+00 : f32
      %67 = vector.broadcast %cst_29 : f32 to vector<8x8xf32>
      %68 = arith.cmpf oge, %37, %67 : vector<8x8xf32>
      %cst_30 = arith.constant 3.14159274 : f32
      %69 = vector.broadcast %cst_30 : f32 to vector<8x8xf32>
      %70 = arith.subf %69, %66 : vector<8x8xf32>
      %71 = arith.select %68, %66, %70 : vector<8x8xi1>, vector<8x8xf32>
      %72 = arith.cmpi sgt, %14, %13 : vector<8x8xi32>
      %73 = arith.mulf %71, %71 : vector<8x8xf32>
      %cst_31 = arith.constant 1.000000e+00 : f32
      %74 = vector.broadcast %cst_31 : f32 to vector<8x8xf32>
      %75 = arith.divf %74, %73 : vector<8x8xf32>
      %cst_32 = arith.constant 0.000000e+00 : f32
      %76 = vector.broadcast %cst_32 : f32 to vector<8x8xf32>
      %77 = arith.select %72, %75, %76 : vector<8x8xi1>, vector<8x8xf32>
      %cst_33 = arith.constant dense<0.000000e+00> : vector<8xf32>
      %78 = vector.multi_reduction <add>, %77, %cst_33 [1] : vector<8x8xf32> to vector<8xf32>
      %79 = vector.shape_cast %78 : vector<8xf32> to vector<8x1xf32>
      %cst_34 = arith.constant dense<0.000000e+00> : vector<1xf32>
      %80 = vector.multi_reduction <add>, %79, %cst_34 [0] : vector<8x1xf32> to vector<1xf32>
      %81 = vector.shape_cast %80 : vector<1xf32> to vector<1x1xf32>
      %cst_35 = arith.constant 0.0357142873 : f32
      %82 = vector.broadcast %cst_35 : f32 to vector<1x1xf32>
      %83 = arith.mulf %81, %82 : vector<1x1xf32>
      %c0_36 = arith.constant 0 : index
      %c0_37 = arith.constant 0 : index
      %c0_38 = arith.constant 0 : index
      %84 = vector.load %arg3[%c0_36, %c0_37, %c0_38] : memref<1x1x1xf32, #tpu.memory_space<vmem>>, vector<1x1x1xf32>
      %85 = vector.shape_cast %84 : vector<1x1x1xf32> to vector<1x1xf32>
      %86 = vector.shape_cast %83 : vector<1x1xf32> to vector<1x1x1xf32>
      tpu.vector_store %arg3[%c0_36, %c0_37, %c0_38], %86 {strides = array<i32>} : memref<1x1x1xf32, #tpu.memory_space<vmem>>, vector<1x1x1xf32>,
    } else {
    }
    return
  }
  func.func @transform_0(%arg0: i32, %arg1: i32) -> (i32, i32, i32) {
    %c0_i32 = arith.constant 0 : i32
    %c0_i32_0 = arith.constant 0 : i32
    return %arg0, %c0_i32, %arg1 : i32, i32, i32
  }
  func.func @transform_1(%arg0: i32, %arg1: i32) -> (i32, i32, i32) {
    %c0_i32 = arith.constant 0 : i32
    %c0_i32_0 = arith.constant 0 : i32
    %c0_i32_1 = arith.constant 0 : i32
    return %arg0, %c0_i32, %c0_i32_0 : i32, i32, i32
  }
}

</mosaic_0001>

<llo_original>
// kernel: mhe_loss_pallas.1
$region0: #{mhe_loss_pallas.1}
  #allocation0 [shape = 'u32[]', space=smem, size = 0x4, offset = 0x4, fixed_abs, tag = 'smem constant byte address 0x4 - core index']
  #allocation1 [shape = 'u32[144,128]{1,0:T(1,128)}', space=vmem, size = 0x12000, scoped, tag = 'internal scratch']
  #allocation2 [shape = 'f32[8,8]{1,0:T(8,128)}', space=vmem, size = 0x1000, scoped, tag = 'scratch operand']
  %s0 = inlined_call_operand.hbm [shape: f32[1,8,256], index: 0, kind: input, shape index: {}]
  %s1 = inlined_call_operand.hbm [shape: f32[1,1,1], index: 1, kind: output, shape index: {}]
  %s2 = sld [smem:[#allocation0]]
  $region26: #{mhe_loss_pallas.1} parent=0
    _
  %s4 = ssub.s32 1, %s2
  %s5 = scalar_select 0, %s4, %s2
  $region1: #{mhe_loss_pallas.1} parent=0
    #allocation3 [shape = 'u8[8192]{0}', space=vmem, size = 0x2000, scoped, tag = 'input window, operand 0, single buffered']
    #allocation4 [shape = 's32[1]{0}', space=sflag, size = 0x4, scoped, tag = 'scoped memory for mhe_loss_pallas.1']
    #allocation5 [shape = 's32[1]{0}', space=sflag, size = 0x4, scoped, tag = 'scoped memory for mhe_loss_pallas.1']
    #allocation6 [shape = 'u8[512]{0}', space=vmem, size = 0x400, scoped, tag = 'output window, operand 0, single buffered']
    %6 = vsyncpa [#allocation4], 0
    %7 = vsyncpa [#allocation5], 0
    // Predicated region
    $region2: #{mhe_loss_pallas.1} parent=1 // pred_check
      _
    $region3: #{mhe_loss_pallas.1} parent=1 // pred_check_branch
      %9 = sbr.rel (0) target = $region5
    $region4: #{mhe_loss_pallas.1} parent=1 // pred_region
      %s11 = ssub.s32 256, 256
      %12 = vsyncadd [#allocation4], %s11
      %s14 = sshll.u32 [#allocation3], 4
      %s15 = int_to_ptr.vmem [resolvable:$true] %s14
      %17 = dma.hbm_to_vmem [thread:$0]  %s0, 256, %s15, [#allocation4]
    $region5: #{mhe_loss_pallas.1} parent=1 // pred_fallthru
      _
    // Predicated region
    $region6: #{mhe_loss_pallas.1} parent=1 // pred_check
      _
    $region7: #{mhe_loss_pallas.1} parent=1 // pred_check_branch
      %19 = sbr.rel (0) target = $region9
    $region8: #{mhe_loss_pallas.1} parent=1 // pred_region
      %20 = dma.done [#allocation4], 256
    $region9: #{mhe_loss_pallas.1} parent=1 // pred_fallthru
      _
    %p21 = scmp.eq.s32.totalorder 0, 0
    // Predicated region
    $region10: #{mhe_loss_pallas.1} parent=1 // pred_check
      %p22 = pneg %p21
    $region11: #{mhe_loss_pallas.1} parent=1 // pred_check_branch
      %24 = sbr.rel (%p22) target = $region13
    $region12: #{mhe_loss_pallas.1} parent=1 // pred_region
      %vm25 = vcmask 64512
      %26 = vst.msk [vmem:[#allocation2] sm:$0xff] %vm25, 0.0
    $region13: #{mhe_loss_pallas.1} parent=1 // pred_fallthru
      _
    %v27 = vld [vmem:[#allocation3] sm:$0xff]
    %v28 = vld [vmem:[#allocation3 + $0x8] sm:$0xff]
    %v29 = vld [vmem:[#allocation2] sm:$0xff]
    %30 = vmatprep.subr.mxu0 0.0
    %31 = vmatpush1.xpose.msra.mxu0 0.0
    %32 = vmatprep.subr.mxu0 0.0
    %33 = vmatpush1.xpose.msra.mxu0 0.0
    %34 = vmatprep.subr.mxu0 0.0
    %35 = vmatpush1.xpose.msra.mxu0 0.0
    %36 = vmatprep.subr.mxu0 0.0
    %37 = vmatpush1.xpose.msra.mxu0 0.0
    %38 = vmatprep.subr.mxu0 0.0
    %39 = vmatpush1.xpose.msra.mxu0 0.0
    %40 = vmatprep.subr.mxu0 0.0
    %41 = vmatpush1.xpose.msra.mxu0 0.0
    %42 = vmatprep.subr.mxu0 0.0
    %43 = vmatpush1.xpose.msra.mxu0 0.0
    %44 = vmatprep.subr.mxu0 0.0
    %45 = vmatpush1.xpose.msra.mxu0 0.0
    %46 = vmatprep.subr.mxu0 0.0
    %47 = vmatpush1.xpose.msra.mxu0 0.0
    %48 = vmatprep.subr.mxu0 0.0
    %49 = vmatpush1.xpose.msra.mxu0 0.0
    %50 = vmatprep.subr.mxu0 0.0
    %51 = vmatpush1.xpose.msra.mxu0 0.0
    %52 = vmatprep.subr.mxu0 0.0
    %53 = vmatpush1.xpose.msra.mxu0 0.0
    %54 = vmatprep.subr.mxu0 0.0
    %55 = vmatpush1.xpose.msra.mxu0 0.0
    %56 = vmatprep.subr.mxu0 0.0
    %57 = vmatpush1.xpose.msra.mxu0 0.0
    %58 = vmatprep.subr.mxu0 0.0
    %59 = vmatpush1.xpose.msra.mxu0 0.0
    %60 = vmatprep.subr.mxu0 %v28
    %61 = vmatpush1.xpose.msra.mxu0 %v27
    %62 = vmatprep.subr.mxu0 0.0
    %63 = vmatpush2.xpose.msra.mxu0 0.0
    %64 = vmatprep.subr.mxu0 0.0
    %65 = vmatpush2.xpose.msra.mxu0 0.0
    %66 = vmatprep.subr.mxu0 0.0
    %67 = vmatpush2.xpose.msra.mxu0 0.0
    %68 = vmatprep.subr.mxu0 0.0
    %69 = vmatpush2.xpose.msra.mxu0 0.0
    %70 = vmatprep.subr.mxu0 0.0
    %71 = vmatpush2.xpose.msra.mxu0 0.0
    %72 = vmatprep.subr.mxu0 0.0
    %73 = vmatpush2.xpose.msra.mxu0 0.0
    %74 = vmatprep.subr.mxu0 0.0
    %75 = vmatpush2.xpose.msra.mxu0 0.0
    %76 = vmatprep.subr.mxu0 0.0
    %77 = vmatpush2.xpose.msra.mxu0 0.0
    %78 = vmatprep.subr.mxu0 0.0
    %79 = vmatpush2.xpose.msra.mxu0 0.0
    %80 = vmatprep.subr.mxu0 0.0
    %81 = vmatpush2.xpose.msra.mxu0 0.0
    %82 = vmatprep.subr.mxu0 0.0
    %83 = vmatpush2.xpose.msra.mxu0 0.0
    %84 = vmatprep.subr.mxu0 0.0
    %85 = vmatpush2.xpose.msra.mxu0 0.0
    %86 = vmatprep.subr.mxu0 0.0
    %87 = vmatpush2.xpose.msra.mxu0 0.0
    %88 = vmatprep.subr.mxu0 0.0
    %89 = vmatpush2.xpose.msra.mxu0 0.0
    %90 = vmatprep.subr.mxu0 0.0
    %91 = vmatpush2.xpose.msra.mxu0 0.0
    %92 = vmatprep.subr.mxu0 0.0
    %93 = vmatpush2.xpose.msra.mxu0 0.0
    %94 = vmatprep.mubr.f32.mxu0 %v28
    %95 = vmatmul.mubr.f32.gmra.mxu0 %v27
    %v96 = vpop.f32.mrf.mxu0
    %v97 = vadd.f32 0.0, %v96
    %v98 = vpop.f32.mrf.mxu0
    %99 = vdwg.mxu0
    %v100 = vadd.f32 %v29, %v97
    %vm101 = vcmask 64512
    %102 = vst.msk [vmem:[#allocation2] sm:$0xff] %vm101, %v100
    // Predicated region
    $region14: #{mhe_loss_pallas.1} parent=1 // pred_check
      %p103 = pneg %p21
    $region15: #{mhe_loss_pallas.1} parent=1 // pred_check_branch
      %105 = sbr.rel (%p103) target = $region17
    $region16: #{mhe_loss_pallas.1} parent=1 // pred_region
      %v106 = vld [vmem:[#allocation2] sm:$0xff]
      %v107 = vlaneseq
      %v108 = vshrl.u32 %v107, 7
      %v109 = vlaneseq
      %v110 = vand.u32 %v109, 127
      %vm111 = vcmp.eq.s32.totalorder %v108, %v110
      %v112 = vsel %vm111, %v106, 0.0
      %v113 = vsel %vm101, %v112, 0.0
      %v114 = vrot.slane %v113, 4
      %v115 = vadd.f32 %v113, %v114
      %v116 = vrot.slane %v115, 2
      %v117 = vadd.f32 %v115, %v116
      %v118 = vrot.slane %v117, 1
      %v119 = vadd.f32 %v117, %v118
      %120 = vadd.xlane.f32.xlu0 %v113
      %v121 = vpop.xlane.xlu0 %120
      %v122 = vmax.f32 %v119, 1e-24
      %v123 = vrsqrt.pop %v122
      %v124 = vmax.f32 %v121, 1e-24
      %v125 = vrsqrt.pop %v124
      %v126 = vmul.f32 %v106, %v125
      %v127 = vmul.f32 %v126, %v123
      %v128 = vmax.f32 %v127, -0.99999
      %v129 = vmin.f32 %v128, 0.99999
      %v130 = vand.u32 2147483647, %v129
      %v131 = vmul.f32 %v130, -0.0012624911
      %v132 = vadd.f32 %v131, 0.00667009
      %v133 = vmul.f32 %v132, %v130
      %v134 = vadd.f32 %v133, -0.017088126
      %v135 = vmul.f32 %v134, %v130
      %v136 = vadd.f32 %v135, 0.03089188
      %v137 = vmul.f32 %v136, %v130
      %v138 = vadd.f32 %v137, -0.050174303
      %v139 = vmul.f32 %v138, %v130
      %v140 = vadd.f32 %v139, 0.08897899
      %v141 = vmul.f32 %v140, %v130
      %v142 = vadd.f32 %v141, -0.2145988
      %v143 = vmul.f32 %v142, %v130
      %v144 = vadd.f32 %v143, 1.5707963
      %v145 = vsub.f32 1.0, %v130
      %v146 = vmax.f32 %v145, 0.0
      %v147 = vrsqrt.pop %v146
      %v148 = vmul.f32 %v146, %v147
      %vm149 = vcmp.eq.f32.partialorder %v146, inf
      %v150 = vsel %vm149, %v146, %v148
      %vm151 = vcmp.eq.f32.partialorder %v146, 0.0
      %v152 = vand.u32 %v146, 2147483648
      %v153 = vsel %vm151, %v152, %v150
      %v154 = vmul.f32 %v153, %v144
      %vm155 = vcmp.ge.f32.partialorder %v129, 0.0
      %v156 = vsub.f32 3.1415927, %v154
      %v157 = vsel %vm155, %v154, %v156
      %vm158 = vcmp.gt.s32.totalorder %v110, %v108
      %v159 = vmul.f32 %v157, %v157
      %v160 = vrcp.pop %v159
      %v161 = vmul.f32 1.0, %v160
      %v162 = vsel %vm158, %v161, 0.0
      %v163 = vsel %vm101, %v162, 0.0
      %164 = vadd.xlane.f32.xlu0 %v163
      %v165 = vpop.xlane.xlu0 %164
      %v166 = vrot.slane %v165, 4
      %v167 = vadd.f32 %v165, %v166
      %v168 = vrot.slane %v167, 2
      %v169 = vadd.f32 %v167, %v168
      %v170 = vrot.slane %v169, 1
      %v171 = vadd.f32 %v169, %v170
      %v172 = vmul.f32 %v171, 0.035714287
      %vm173 = vcmask 0
      %174 = vst.msk [vmem:[#allocation6] sm:$0x1] %vm173, %v172
    $region17: #{mhe_loss_pallas.1} parent=1 // pred_fallthru
      _
    // Predicated region
    $region18: #{mhe_loss_pallas.1} parent=1 // pred_check
      _
    $region19: #{mhe_loss_pallas.1} parent=1 // pred_check_branch
      %176 = sbr.rel (0) target = $region21
    $region20: #{mhe_loss_pallas.1} parent=1 // pred_region
      %s178 = ssub.s32 16, 16
      %179 = vsyncadd [#allocation5], %s178
      %s181 = sshll.u32 [#allocation6], 4
      %s182 = int_to_ptr.vmem [resolvable:$true] %s181
      %184 = dma.vmem_to_hbm [thread:$0]  %s182, 16, %s1, [#allocation5]
    $region21: #{mhe_loss_pallas.1} parent=1 // pred_fallthru
      _
    // Predicated region
    $region22: #{mhe_loss_pallas.1} parent=1 // pred_check
      _
    $region23: #{mhe_loss_pallas.1} parent=1 // pred_check_branch
      %186 = sbr.rel (0) target = $region25
    $region24: #{mhe_loss_pallas.1} parent=1 // pred_region
      %187 = dma.done [#allocation5], 16
    $region25: #{mhe_loss_pallas.1} parent=1 // pred_fallthru
      _
    %188 = vsyncpa [#allocation4], 1
    %189 = vsyncpa [#allocation5], 1

</llo_original>
